<compile_context>
chip_gen: v5e
topology: v5e:2x2
jax: 0.10.0
libtpu: 0.0.40
codegen_flags: <defaults>
</compile_context>

<pallas_src>
import functools

import jax
import jax.numpy as jnp
from jax.experimental import pallas as pl
from jax.experimental.pallas import tpu as pltpu


def _round_up(x, m):
    return ((x + m - 1) // m) * m


# ----------------------------------------------------------------------------
# Kernel 1: asymmetric per-output-channel weight quantization (emit q/scale/zp)
#   matches AsymmetricQuantFunction:
#     n     = 2**k - 1
#     scale = n / clamp(w_max - w_min, min=1e-8)          (per out channel)
#     zp    = round(scale * w_min) + 2**(k-1)             (signed)
#     q     = clip(round(scale*w - zp), -2**(k-1), 2**(k-1)-1)
#   (dequant  w_q = (q + zp) / scale  happens inside the conv matmul kernel)
# ----------------------------------------------------------------------------
def _quant_weight_kernel(w_ref, q_ref, scale_ref, zp_ref, *, weight_bit):
    w = w_ref[...]                                   # (tc, K_pad), edge-padded along K
    w_min = jnp.min(w, axis=1, keepdims=True)        # (tc, 1)  (edge-pad keeps min/max exact)
    w_max = jnp.max(w, axis=1, keepdims=True)        # (tc, 1)
    n = (2.0 ** weight_bit) - 1.0
    scale = n / jnp.maximum(w_max - w_min, 1e-8)
    zero_point = jnp.round(scale * w_min) + 2.0 ** (weight_bit - 1)
    qmin = -(2.0 ** (weight_bit - 1))
    qmax = 2.0 ** (weight_bit - 1) - 1.0
    q = jnp.clip(jnp.round(scale * w - zero_point), qmin, qmax)
    q_ref[...] = q.astype(q_ref.dtype)               # int8 (lossless for <=8-bit quant)
    scale_ref[...] = scale.astype(scale_ref.dtype)
    zp_ref[...] = zero_point.astype(zp_ref.dtype)


def quantize_weight(w_pad, weight_bit, *, tc):
    cout_p, k_p = w_pad.shape
    return pl.pallas_call(
        functools.partial(_quant_weight_kernel, weight_bit=weight_bit),
        out_shape=(
            jax.ShapeDtypeStruct((cout_p, k_p), jnp.int8),
            jax.ShapeDtypeStruct((cout_p, 1), jnp.float32),
            jax.ShapeDtypeStruct((cout_p, 1), jnp.float32),
        ),
        grid_spec=pltpu.PrefetchScalarGridSpec(
            num_scalar_prefetch=0,
            grid=(cout_p // tc,),
            in_specs=[pl.BlockSpec((tc, k_p), lambda i: (i, 0))],
            out_specs=(
                pl.BlockSpec((tc, k_p), lambda i: (i, 0)),
                pl.BlockSpec((tc, 1), lambda i: (i, 0)),
                pl.BlockSpec((tc, 1), lambda i: (i, 0)),
            ),
        ),
        compiler_params=pltpu.CompilerParams(
            dimension_semantics=("parallel",),
        ),
    )(w_pad)


# ----------------------------------------------------------------------------
# Kernel 2: conv-as-matmul with fused weight dequantization
#   out(Cout, M) = dequant(q)(Cout, K) @ cols(K, M) + bias
#   Grid (Cout/tc, M/tm, K/tk); K is the (arbitrary) reduction axis.
# ----------------------------------------------------------------------------
def _conv_matmul_kernel(q_ref, a_ref, scale_ref, zp_ref, b_ref, o_ref, acc_ref):
    ki = pl.program_id(2)

    @pl.when(ki == 0)
    def _():
        acc_ref[...] = jnp.zeros_like(acc_ref)

    # In-kernel per-channel dequantization of the weight K-tile.
    inv_scale = 1.0 / scale_ref[...]                                   # (tc, 1)
    w = (q_ref[...].astype(jnp.float32) + zp_ref[...]) * inv_scale     # (tc, tk)
    acc_ref[...] += jnp.dot(w, a_ref[...], preferred_element_type=jnp.float32)

    @pl.when(ki == pl.num_programs(2) - 1)
    def _():
        # Bias only in the finalize step; output block (tc, tm) is lane-dense in M.
        o_ref[...] = (acc_ref[...] + b_ref[...]).astype(o_ref.dtype)


def conv_matmul(q, cols, scale, zp, bias2d, *, tc, tm, tk):
    cout_p, k_p = q.shape
    _, m_p = cols.shape
    grid = (cout_p // tc, m_p // tm, k_p // tk)
    return pl.pallas_call(
        _conv_matmul_kernel,
        out_shape=jax.ShapeDtypeStruct((cout_p, m_p), jnp.float32),
        grid_spec=pltpu.PrefetchScalarGridSpec(
            num_scalar_prefetch=0,
            grid=grid,
            in_specs=[
                pl.BlockSpec((tc, tk), lambda c, m, k: (c, k)),   # q (int8)
                pl.BlockSpec((tk, tm), lambda c, m, k: (k, m)),   # cols
                pl.BlockSpec((tc, 1), lambda c, m, k: (c, 0)),    # scale
                pl.BlockSpec((tc, 1), lambda c, m, k: (c, 0)),    # zero_point
                pl.BlockSpec((tc, 1), lambda c, m, k: (c, 0)),    # bias
            ],
            out_specs=pl.BlockSpec((tc, tm), lambda c, m, k: (c, m)),
            scratch_shapes=[pltpu.VMEM((tc, tm), jnp.float32)],
        ),
        compiler_params=pltpu.CompilerParams(
            dimension_semantics=("parallel", "parallel", "arbitrary"),
            vmem_limit_bytes=32 * 1024 * 1024,   # safe on v5e/v6e (128 MiB) and v7x (64 MiB)
        ),
    )(q, cols, scale, zp, bias2d)


# ----------------------------------------------------------------------------
# im2col glue (plain JAX): produces cols in (K, M) layout so M = N*OH*OW is the
# lane axis of the matmul output.  K flattening order matches torch's
# weight.view(Cout, -1), i.e. (Cin, KH, KW) with Cin major.
# ----------------------------------------------------------------------------
def im2col_km(x, kh, kw, stride, padding, dilation):
    n, c, h, w = x.shape
    sh, sw = stride
    ph, pw = padding
    dh, dw = dilation
    oh = (h + 2 * ph - dh * (kh - 1) - 1) // sh + 1
    ow = (w + 2 * pw - dw * (kw - 1) - 1) // sw + 1
    xp = jnp.pad(x, ((0, 0), (0, 0), (ph, ph), (pw, pw)))
    patches = []
    for i in range(kh):
        for j in range(kw):
            h0, w0 = i * dh, j * dw
            patches.append(
                xp[:, :, h0:h0 + (oh - 1) * sh + 1:sh, w0:w0 + (ow - 1) * sw + 1:sw]
            )
    # (N, Cin, KH*KW, OH*OW) with Cin major -> (K, N*OH*OW)
    cols = jnp.stack(patches, axis=2).reshape(n, c * kh * kw, oh * ow)
    cols = cols.transpose(1, 0, 2).reshape(c * kh * kw, n * oh * ow)
    return cols, oh, ow


# ----------------------------------------------------------------------------
# Quant_Conv2d forward
# ----------------------------------------------------------------------------
def quant_conv2d_forward(x, weight, bias, *, weight_bit, stride, padding,
                         dilation, full_precision_flag=False):
    cout, cin, kh, kw = weight.shape
    k = cin * kh * kw
    n = x.shape[0]
    if bias is None:
        bias = jnp.zeros((cout,), jnp.float32)

    # im2col (glue) and problem sizes.
    cols, oh, ow = im2col_km(x, kh, kw, stride, padding, dilation)   # (K, M)
    m = cols.shape[1]

    # Tile sizes (conservative across v5e/v6e/v7x VMEM budgets), then pad dims to tiles.
    tc = min(128, _round_up(cout, 8))
    tk = min(512, _round_up(k, 128))
    tm = min(256, _round_up(m, 128))
    cout_p = _round_up(cout, tc)
    k_p = _round_up(k, tk)
    m_p = _round_up(m, tm)

    # Pad weight with edge replication: preserves per-channel min/max; padded K lanes
    # multiply zero-padded cols rows, so they contribute nothing.
    w_flat = weight.reshape(cout, k)
    w_pad = jnp.pad(w_flat, ((0, cout_p - cout), (0, k_p - k)), mode="edge")
    cols_p = jnp.pad(cols, ((0, k_p - k), (0, m_p - m)))
    bias2d = jnp.pad(bias.reshape(cout, 1).astype(jnp.float32),
                     ((0, cout_p - cout), (0, 0)))

    if not full_precision_flag:
        q, scale, zp = quantize_weight(w_pad, weight_bit, tc=tc)     # Pallas kernel
    else:
        # Identity "quantization": dequant in the matmul kernel gives w back exactly.
        q = w_pad
        scale = jnp.ones((cout_p, 1), jnp.float32)
        zp = jnp.zeros((cout_p, 1), jnp.float32)

    out = conv_matmul(q, cols_p, scale, zp, bias2d, tc=tc, tm=tm, tk=tk)  # (Cout_p, M_p)
    out = out[:cout, :m]
    return out.reshape(cout, n, oh, ow).transpose(1, 0, 2, 3)             # -> NCHW


if __name__ == "__main__":
    # Module config (set_param from a conv: Cin=4 -> Cout=8, 3x3, stride 1, pad 1)
    WEIGHT_BIT = 4
    N, CIN, H, W = 2, 4, 16, 16
    COUT, KH, KW = 8, 3, 3
    STRIDE, PADDING, DILATION = (1, 1), (1, 1), (1, 1)

    key = jax.random.PRNGKey(0)
    kx, kw_, kb = jax.random.split(key, 3)
    fan_in = CIN * KH * KW
    bound = 1.0 / (fan_in ** 0.5)
    x = jax.random.normal(kx, (N, CIN, H, W), dtype=jnp.float32)
    weight = jax.random.uniform(kw_, (COUT, CIN, KH, KW), minval=-bound,
                                maxval=bound, dtype=jnp.float32)
    bias = jax.random.uniform(kb, (COUT,), minval=-bound, maxval=bound,
                              dtype=jnp.float32)

    out = quant_conv2d_forward(x, weight, bias, weight_bit=WEIGHT_BIT,
                               stride=STRIDE, padding=PADDING,
                               dilation=DILATION, full_precision_flag=False)
    out = jax.block_until_ready(out)
    assert out.shape == (N, COUT, H, W), out.shape

    # Reference check in plain JAX (same quantization math + lax.conv).
    w_flat = weight.reshape(COUT, -1)
    w_min = w_flat.min(axis=1, keepdims=True)
    w_max = w_flat.max(axis=1, keepdims=True)
    n_lv = 2.0 ** WEIGHT_BIT - 1.0
    scale = n_lv / jnp.maximum(w_max - w_min, 1e-8)
    zp = jnp.round(scale * w_min) + 2.0 ** (WEIGHT_BIT - 1)
    q = jnp.clip(jnp.round(scale * w_flat - zp),
                 -(2.0 ** (WEIGHT_BIT - 1)), 2.0 ** (WEIGHT_BIT - 1) - 1.0)
    wq_ref = ((q + zp) / scale).reshape(COUT, CIN, KH, KW)
    ref = jax.lax.conv_general_dilated(
        x, wq_ref, window_strides=STRIDE, padding=[PADDING, PADDING],
        rhs_dilation=DILATION,
        dimension_numbers=("NCHW", "OIHW", "NCHW"),
    ) + bias.reshape(1, COUT, 1, 1)

    assert jnp.allclose(out, ref, atol=1e-4, rtol=1e-4), \
        float(jnp.max(jnp.abs(out - ref)))

    # Also exercise the full-precision path once.
    out_fp = quant_conv2d_forward(x, weight, bias, weight_bit=WEIGHT_BIT,
                                  stride=STRIDE, padding=PADDING,
                                  dilation=DILATION, full_precision_flag=True)
    out_fp = jax.block_until_ready(out_fp)
    ref_fp = jax.lax.conv_general_dilated(
        x, weight, window_strides=STRIDE, padding=[PADDING, PADDING],
        rhs_dilation=DILATION,
        dimension_numbers=("NCHW", "OIHW", "NCHW"),
    ) + bias.reshape(1, COUT, 1, 1)
    assert jnp.allclose(out_fp, ref_fp, atol=1e-4, rtol=1e-4), \
        float(jnp.max(jnp.abs(out_fp - ref_fp)))

    print("KERNEL_OK")
</pallas_src>

<mosaic_0001>
module attributes {stable_mosaic.version = 11 : i64} {
  func.func @_quant_weight_kernel(%arg0: i32, %arg1: memref<8x128xf32, #tpu.memory_space<vmem>>, %arg2: memref<8x128xi8, #tpu.memory_space<vmem>>, %arg3: memref<8x1xf32, #tpu.memory_space<vmem>>, %arg4: memref<8x1xf32, #tpu.memory_space<vmem>>) attributes {dimension_semantics = [#tpu.dimension_semantics<parallel>], iteration_bounds = array<i64: 1>, scalar_prefetch = 0 : i64, scratch_operands = 0 : i64, tpu.core_type = #tpu.core_type<tc>, window_params = [{transform_indices = @transform_0, window_bounds = array<i64: 8, 128>}, {transform_indices = @transform_1, window_bounds = array<i64: 8, 128>}, {transform_indices = @transform_2, window_bounds = array<i64: 8, 1>}, {transform_indices = @transform_3, window_bounds = array<i64: 8, 1>}]} {
    %c0 = arith.constant 0 : index
    %c0_0 = arith.constant 0 : index
    %0 = vector.load %arg1[%c0, %c0_0] : memref<8x128xf32, #tpu.memory_space<vmem>>, vector<8x128xf32>
    %cst = arith.constant dense<0x7F800000> : vector<8xf32>
    %1 = vector.multi_reduction <minimumf>, %0, %cst [1] : vector<8x128xf32> to vector<8xf32>
    %2 = vector.shape_cast %1 : vector<8xf32> to vector<8x1xf32>
    %cst_1 = arith.constant dense<0xFF800000> : vector<8xf32>
    %3 = vector.multi_reduction <maximumf>, %0, %cst_1 [1] : vector<8x128xf32> to vector<8xf32>
    %4 = vector.shape_cast %3 : vector<8xf32> to vector<8x1xf32>
    %5 = arith.subf %4, %2 : vector<8x1xf32>
    %cst_2 = arith.constant 9.99999993E-9 : f32
    %6 = vector.broadcast %cst_2 : f32 to vector<8x1xf32>
    %7 = arith.maximumf %5, %6 : vector<8x1xf32>
    %cst_3 = arith.constant 1.500000e+01 : f32
    %8 = vector.broadcast %cst_3 : f32 to vector<8x1xf32>
    %9 = arith.divf %8, %7 : vector<8x1xf32>
    %10 = arith.mulf %9, %2 : vector<8x1xf32>
    %11 = math.roundeven %10 : vector<8x1xf32>
    %cst_4 = arith.constant 8.000000e+00 : f32
    %12 = vector.broadcast %cst_4 : f32 to vector<8x1xf32>
    %13 = arith.addf %11, %12 : vector<8x1xf32>
    %14 = vector.broadcast %9 : vector<8x1xf32> to vector<8x128xf32>
    %15 = arith.mulf %14, %0 : vector<8x128xf32>
    %16 = vector.broadcast %13 : vector<8x1xf32> to vector<8x128xf32>
    %17 = arith.subf %15, %16 : vector<8x128xf32>
    %18 = math.roundeven %17 : vector<8x128xf32>
    %cst_5 = arith.constant -8.000000e+00 : f32
    %cst_6 = arith.constant 7.000000e+00 : f32
    %19 = vector.broadcast %cst_5 : f32 to vector<8x128xf32>
    %20 = arith.maximumf %19, %18 : vector<8x128xf32>
    %21 = vector.broadcast %cst_6 : f32 to vector<8x128xf32>
    %22 = arith.minimumf %21, %20 : vector<8x128xf32>
    %23 = arith.fptosi %22 : vector<8x128xf32> to vector<8x128xi8>
    %c0_7 = arith.constant 0 : index
    %c0_8 = arith.constant 0 : index
    %24 = vector.load %arg2[%c0_7, %c0_8] : memref<8x128xi8, #tpu.memory_space<vmem>>, vector<8x128xi8>
    tpu.vector_store %arg2[%c0_7, %c0_8], %23 {strides = array<i32>} : memref<8x128xi8, #tpu.memory_space<vmem>>, vector<8x128xi8>,
    %c0_9 = arith.constant 0 : index
    %c0_10 = arith.constant 0 : index
    %25 = vector.load %arg3[%c0_9, %c0_10] : memref<8x1xf32, #tpu.memory_space<vmem>>, vector<8x1xf32>
    tpu.vector_store %arg3[%c0_9, %c0_10], %9 {strides = array<i32>} : memref<8x1xf32, #tpu.memory_space<vmem>>, vector<8x1xf32>,
    %c0_11 = arith.constant 0 : index
    %c0_12 = arith.constant 0 : index
    %26 = vector.load %arg4[%c0_11, %c0_12] : memref<8x1xf32, #tpu.memory_space<vmem>>, vector<8x1xf32>
    tpu.vector_store %arg4[%c0_11, %c0_12], %13 {strides = array<i32>} : memref<8x1xf32, #tpu.memory_space<vmem>>, vector<8x1xf32>,
    return
  }
  func.func @transform_0(%arg0: i32) -> (i32, i32) {
    %c0_i32 = arith.constant 0 : i32
    %c0_i32_0 = arith.constant 0 : i32
    return %arg0, %c0_i32 : i32, i32
  }
  func.func @transform_1(%arg0: i32) -> (i32, i32) {
    %c0_i32 = arith.constant 0 : i32
    %c0_i32_0 = arith.constant 0 : i32
    return %arg0, %c0_i32 : i32, i32
  }
  func.func @transform_2(%arg0: i32) -> (i32, i32) {
    %c0_i32 = arith.constant 0 : i32
    %c0_i32_0 = arith.constant 0 : i32
    return %arg0, %c0_i32 : i32, i32
  }
  func.func @transform_3(%arg0: i32) -> (i32, i32) {
    %c0_i32 = arith.constant 0 : i32
    %c0_i32_0 = arith.constant 0 : i32
    return %arg0, %c0_i32 : i32, i32
  }
}

</mosaic_0001>

<llo_original>
// kernel: tpu_custom_call.1
$region0: #{tpu_custom_call.1}
  #allocation0 [shape = 'u32[]', space=smem, size = 0x4, offset = 0x4, fixed_abs, tag = 'smem constant byte address 0x4 - core index']
  #allocation1 [shape = 'u32[72,128]{1,0:T(1,128)}', space=vmem, size = 0x9000, scoped, tag = 'internal scratch']
  %s0 = inlined_call_operand.hbm [shape: f32[8,128], index: 0, kind: input, shape index: {}]
  %s1 = inlined_call_operand.hbm [shape: s8[8,128], index: 1, kind: output, shape index: {0}]
  %s2 = inlined_call_operand.vmem [shape: f32[8,1], index: 2, kind: output, shape index: {1}]
  %s3 = inlined_call_operand.vmem [shape: f32[8,1], index: 3, kind: output, shape index: {2}]
  %4 = xla_tuple %s1, %s2, %s3
  %s5 = sld [smem:[#allocation0]]
  $region34: #{tpu_custom_call.1} parent=0
    _
  %s7 = ssub.s32 1, %s5
  %s8 = scalar_select 0, %s7, %s5
  $region1: #{tpu_custom_call.1} parent=0
    #allocation2 [shape = 'u8[4096]{0}', space=vmem, size = 0x1000, scoped, tag = 'input window, operand 0, single buffered']
    #allocation3 [shape = 's32[1]{0}', space=sflag, size = 0x4, scoped, tag = 'scoped memory for tpu_custom_call.1']
    #allocation4 [shape = 's32[1]{0}', space=sflag, size = 0x4, scoped, tag = 'scoped memory for tpu_custom_call.1']
    #allocation5 [shape = 'u8[1024]{0}', space=vmem, size = 0x400, scoped, tag = 'output window, operand 0, single buffered']
    %9 = vsyncpa [#allocation3], 0
    %10 = vsyncpa [#allocation4], 0
    // Predicated region
    $region2: #{tpu_custom_call.1} parent=1 // pred_check
      _
    $region3: #{tpu_custom_call.1} parent=1 // pred_check_branch
      %12 = sbr.rel (0) target = $region5
    $region4: #{tpu_custom_call.1} parent=1 // pred_region
      %14 = vsyncadd [#allocation3], 0
      %s16 = sshll.u32 %s0, 4
      %s17 = int_to_ptr.hbm [resolvable:$true] %s16
      %s18 = sshll.u32 [#allocation2], 4
      %s19 = int_to_ptr.vmem [resolvable:$true] %s18
      %21 = dma.hbm_to_vmem [thread:$0]  %s17, 128, %s19, [#allocation3]
    $region5: #{tpu_custom_call.1} parent=1 // pred_fallthru
      _
    // Predicated region
    $region6: #{tpu_custom_call.1} parent=1 // pred_check
      _
    $region7: #{tpu_custom_call.1} parent=1 // pred_check_branch
      %23 = sbr.rel (0) target = $region9
    $region8: #{tpu_custom_call.1} parent=1 // pred_region
      %25 = dma.done [#allocation3], 128
    $region9: #{tpu_custom_call.1} parent=1 // pred_fallthru
      _
    %v26 = vld [vmem:[#allocation2] sm:$0xff]
    %27 = vmin.xlane.f32.xlu0 %v26
    %v28 = vpop.xlane.xlu0 %27
    %29 = vmax.xlane.f32.xlu0 %v26
    %v30 = vpop.xlane.xlu0 %29
    %v31 = vsub.f32 %v30, %v28
    %v32 = vmax.f32 %v31, 1e-08
    %v33 = vrcp.pop %v32
    %v34 = vmul.f32 %v32, %v33
    %v35 = vsub.f32 1.0, %v34
    %v36 = vmul.f32 %v33, %v35
    %v37 = vadd.f32 %v33, %v36
    %vm38 = vweird.f32 %v32
    %vm39 = vweird.f32 %v33
    %vm40 = vmor %vm38, %vm39
    %v41 = vsel %vm40, %v33, %v37
    %v42 = vand.u32 2147483647, %v32
    %vm43 = vcmp.eq.f32.partialorder %v42, 8.507059e+37
    %v44 = vand.u32 %v32, 2147483648
    %v45 = vor.u32 1.1754944e-38, %v44
    %v46 = vsel %vm43, %v45, %v41
    %v47 = vmul.f32 15.0, %v46
    %v48 = vmul.f32 %v47, %v28
    %v49 = vround.ne.pseudo %v48
    %v50 = vadd.f32 %v49, 8.0
    %v51 = vmul.f32 %v47, %v26
    %v52 = vsub.f32 %v51, %v50
    %v53 = vround.ne.pseudo %v52
    %v54 = vmax.f32 %v53, -8.0
    %v55 = vmin.f32 %v54, 7.0
    %v56 = vmax.f32 %v55, -128.0
    %v57 = vmin.f32 %v56, 127.0
    %v58 = vcvt.f32.s32.to.zero.pseudo %v57
    %v59 = vpack.c.b16 %v58, %v58
    %v60 = vpack.c.b8 %v59, %v59
    %61 = vst [vmem:[#allocation5] sm:$0x3] %v60
    %vm62 = vcmask 7168
    %63 = vst.msk [vmem:[%s2] sm:$0xff] %vm62, %v47
    %64 = vst.msk [vmem:[%s3] sm:$0xff] %vm62, %v50
    // Predicated region
    $region10: #{tpu_custom_call.1} parent=1 // pred_check
      _
    $region11: #{tpu_custom_call.1} parent=1 // pred_check_branch
      %66 = sbr.rel (0) target = $region13
    $region12: #{tpu_custom_call.1} parent=1 // pred_region
      %68 = vsyncadd [#allocation4], 0
      %s70 = sshll.u32 [#allocation5], 4
      %s71 = int_to_ptr.vmem [resolvable:$true] %s70
      %s72 = sshll.u32 %s1, 4
      %s73 = int_to_ptr.hbm [resolvable:$true] %s72
      %75 = dma.vmem_to_hbm [thread:$0]  %s71, 32, %s73, [#allocation4]
    $region13: #{tpu_custom_call.1} parent=1 // pred_fallthru
      _
    // Predicated region
    $region14: #{tpu_custom_call.1} parent=1 // pred_check
      _
    $region15: #{tpu_custom_call.1} parent=1 // pred_check_branch
      %77 = sbr.rel (0) target = $region17
    $region16: #{tpu_custom_call.1} parent=1 // pred_region
      _
    $region17: #{tpu_custom_call.1} parent=1 // pred_fallthru
      _
    // Predicated region
    $region18: #{tpu_custom_call.1} parent=1 // pred_check
      _
    $region19: #{tpu_custom_call.1} parent=1 // pred_check_branch
      %79 = sbr.rel (0) target = $region21
    $region20: #{tpu_custom_call.1} parent=1 // pred_region
      _
    $region21: #{tpu_custom_call.1} parent=1 // pred_fallthru
      _
    // Predicated region
    $region22: #{tpu_custom_call.1} parent=1 // pred_check
      _
    $region23: #{tpu_custom_call.1} parent=1 // pred_check_branch
      %81 = sbr.rel (0) target = $region25
    $region24: #{tpu_custom_call.1} parent=1 // pred_region
      %83 = dma.done [#allocation4], 32
    $region25: #{tpu_custom_call.1} parent=1 // pred_fallthru
      _
    // Predicated region
    $region26: #{tpu_custom_call.1} parent=1 // pred_check
      _
    $region27: #{tpu_custom_call.1} parent=1 // pred_check_branch
      %85 = sbr.rel (0) target = $region29
    $region28: #{tpu_custom_call.1} parent=1 // pred_region
      _
    $region29: #{tpu_custom_call.1} parent=1 // pred_fallthru
      _
    // Predicated region
    $region30: #{tpu_custom_call.1} parent=1 // pred_check
      _
    $region31: #{tpu_custom_call.1} parent=1 // pred_check_branch
      %87 = sbr.rel (0) target = $region33
    $region32: #{tpu_custom_call.1} parent=1 // pred_region
      _
    $region33: #{tpu_custom_call.1} parent=1 // pred_fallthru
      _
    %88 = vsyncpa [#allocation3], 1
    %89 = vsyncpa [#allocation4], 1

</llo_original>
